<compile_context>
chip_gen: v6e
topology: v6e:2x2x1
jax: 0.10.0
libtpu: 0.0.40
codegen_flags: <defaults>
</compile_context>

<pallas_src>
import functools
import math

import jax
import jax.numpy as jnp
from jax.experimental import pallas as pl
from jax.experimental.pallas import tpu as pltpu

BN_EPS = 1e-5
LANE = 128          # TPU lane width: all feature dims are zero-padded to 128.
IN_PAD_MULT = 16    # bf16 packs 16 rows per sublane tile -> pad fc1's K dim to 16.


def _vmem_limit_bytes():
    """Generation-aware scoped-VMEM limit (~3/4 of physical: ~48 MiB on v7x,
    ~96 MiB on v5e/v6e). Falls back to 32 MiB if the query is unavailable."""
    try:
        cap = int(pltpu.get_tpu_info().vmem_capacity_bytes)
        return (cap * 3) // 4
    except Exception:
        return 32 * 1024 * 1024


# --------------------------------------------------------------------------- #
# Small-batch path: whole batch in one VMEM block (fully fused, two-pass BN). #
# --------------------------------------------------------------------------- #
def _single_block_kernel(x_ref, w1_ref, w2_ref, w3_ref, p_ref, o_ref):
    """x_ref: [B, in_pad]; w*: zero-padded weights; p_ref: (8,128) f32 packed
    rows (g1, be1, g2, be2, b3, 0, 0, 0); o_ref: [B,128] f32 lane-dense slab
    (column 0 is the real output, sliced in the wrapper)."""
    mm_dtype = w1_ref.dtype
    g1, be1 = p_ref[0:1, :], p_ref[1:2, :]
    g2, be2 = p_ref[2:3, :], p_ref[3:4, :]
    b3 = p_ref[4:5, :]

    # fc1 + BN1 (batch stats, two-pass) + ReLU
    h = jnp.dot(x_ref[...], w1_ref[...], preferred_element_type=jnp.float32)
    mu = jnp.mean(h, axis=0, keepdims=True)
    c = h - mu
    var = jnp.mean(c * c, axis=0, keepdims=True)          # biased variance
    h = jnp.maximum(c * (g1 * jax.lax.rsqrt(var + BN_EPS)) + be1, 0.0)

    # fc2 + BN2 + ReLU
    h = jnp.dot(h.astype(mm_dtype), w2_ref[...], preferred_element_type=jnp.float32)
    mu = jnp.mean(h, axis=0, keepdims=True)
    c = h - mu
    var = jnp.mean(c * c, axis=0, keepdims=True)
    h = jnp.maximum(c * (g2 * jax.lax.rsqrt(var + BN_EPS)) + be2, 0.0)

    # fc3 + sigmoid (lane-dense 128-wide store; only column 0 is real)
    y = jnp.dot(h.astype(mm_dtype), w3_ref[...], preferred_element_type=jnp.float32) + b3
    o_ref[...] = jax.nn.sigmoid(y)


def _forward_single_block(xm, params, true_b, out_size):
    vmem = pl.BlockSpec(memory_space=pltpu.MemorySpace.VMEM)
    out_pad = pl.pallas_call(
        _single_block_kernel,
        out_shape=jax.ShapeDtypeStruct((true_b, LANE), jnp.float32),
        in_specs=[vmem] * 5,
        out_specs=vmem,
        compiler_params=pltpu.CompilerParams(vmem_limit_bytes=_vmem_limit_bytes()),
    )(xm, params["w1"], params["w2"], params["w3"], params["small"])
    return out_pad[:, :out_size]


# --------------------------------------------------------------------------- #
# Large-batch path: 3 batch-tiled sweeps with exact full-batch BN statistics. #
# --------------------------------------------------------------------------- #
def _stats1_kernel(x_ref, w1_ref, s_ref):
    """Per-tile sum / sum-of-squares of the fc1 pre-activations."""
    h = jnp.dot(x_ref[...], w1_ref[...], preferred_element_type=jnp.float32)
    # Zero-padded batch rows (x rows are zero) contribute exact zeros to both sums.
    s_ref[0:1, :] = jnp.sum(h, axis=0, keepdims=True)
    s_ref[1:2, :] = jnp.sum(h * h, axis=0, keepdims=True)


def _stats2_kernel(true_b, tb, mm_dtype, x_ref, w1_ref, w2_ref, bn1_ref, s_ref):
    """Recompute fc1, apply fused BN1+ReLU, fc2; per-tile stats of fc2 pre-acts."""
    h1 = jnp.dot(x_ref[...], w1_ref[...], preferred_element_type=jnp.float32)
    a1 = jnp.maximum(h1 * bn1_ref[0:1, :] + bn1_ref[1:2, :], 0.0)
    h2 = jnp.dot(a1.astype(mm_dtype), w2_ref[...], preferred_element_type=jnp.float32)
    # Rows past the true batch would otherwise contribute relu(shift1) @ W2 != 0.
    row = pl.program_id(0) * tb + jax.lax.broadcasted_iota(jnp.int32, (tb, 1), 0)
    h2 = jnp.where(row < true_b, h2, 0.0)
    s_ref[0:1, :] = jnp.sum(h2, axis=0, keepdims=True)
    s_ref[1:2, :] = jnp.sum(h2 * h2, axis=0, keepdims=True)


def _final_kernel(out_size, mm_dtype, x_ref, w1_ref, w2_ref, w3_ref,
                  bn1_ref, bn2_ref, o_ref):
    """Recompute both layers, apply BN2+ReLU, fc3 (+b3), transpose so the real
    output feature(s) become lane-dense rows, sigmoid + store only those rows."""
    h1 = jnp.dot(x_ref[...], w1_ref[...], preferred_element_type=jnp.float32)
    a1 = jnp.maximum(h1 * bn1_ref[0:1, :] + bn1_ref[1:2, :], 0.0)
    h2 = jnp.dot(a1.astype(mm_dtype), w2_ref[...], preferred_element_type=jnp.float32)
    a2 = jnp.maximum(h2 * bn2_ref[0:1, :] + bn2_ref[1:2, :], 0.0)
    y = jnp.dot(a2.astype(mm_dtype), w3_ref[...], preferred_element_type=jnp.float32)
    y = y + bn2_ref[2:3, :]          # fc3 bias on feature lanes (cheap VPU add)
    y_t = jnp.transpose(y)           # (128, TB): XLU slot, otherwise idle here
    # Sigmoid (EUP) + HBM writeback only on the real output rows: 128x less work
    # than the naive (TB, 128) f32 slab.
    o_ref[...] = jax.nn.sigmoid(y_t[0:out_size, :])


def _finalize_bn(part_sums, gamma, beta, true_b):
    """Fold per-tile (sum, sumsq) partials into a fused BN scale/shift.
    Single-pass variance E[h^2] - mu^2 (clamped at 0); with kaiming-scaled
    pre-activations mu ~ 0, so the cancellation is benign in f32."""
    s = jnp.sum(part_sums, axis=0)                          # (2, 128)
    mu = s[0] / true_b
    var = jnp.maximum(s[1] / true_b - mu * mu, 0.0)
    scale = gamma * jax.lax.rsqrt(var + BN_EPS)             # pad lanes: gamma=0 -> 0
    shift = beta - mu * scale
    return scale, shift


def _forward_gridded(xm, params, true_b, out_size, tb):
    in_pad = xm.shape[1]
    mm_dtype = xm.dtype
    nb = pl.cdiv(true_b, tb)
    b_pad = nb * tb
    if b_pad != true_b:
        xm = jnp.pad(xm, ((0, b_pad - true_b), (0, 0)))

    w1, w2, w3, small = params["w1"], params["w2"], params["w3"], params["small"]

    cparams = pltpu.CompilerParams(
        dimension_semantics=("parallel",),          # v7x: both TensorCores split the batch
        vmem_limit_bytes=_vmem_limit_bytes())

    x_spec = pl.BlockSpec((tb, in_pad), lambda i: (i, 0))
    w1_spec = pl.BlockSpec((in_pad, LANE), lambda i: (0, 0))
    w_spec = pl.BlockSpec((LANE, LANE), lambda i: (0, 0))
    bn_spec = pl.BlockSpec((8, LANE), lambda i: (0, 0))
    stats_spec = pl.BlockSpec((None, 2, LANE), lambda i: (i, 0, 0))
    stats_shape = jax.ShapeDtypeStruct((nb, 2, LANE), jnp.float32)

    # Sweep 1: batch statistics of the fc1 pre-activations.
    s1 = pl.pallas_call(
        _stats1_kernel, grid=(nb,),
        in_specs=[x_spec, w1_spec], out_specs=stats_spec, out_shape=stats_shape,
        compiler_params=cparams)(xm, w1)
    scale1, shift1 = _finalize_bn(s1, small[0], small[1], true_b)
    bn1 = jnp.zeros((8, LANE), jnp.float32).at[0].set(scale1).at[1].set(shift1)

    # Sweep 2: batch statistics of the fc2 pre-activations.
    s2 = pl.pallas_call(
        functools.partial(_stats2_kernel, true_b, tb, mm_dtype), grid=(nb,),
        in_specs=[x_spec, w1_spec, w_spec, bn_spec],
        out_specs=stats_spec, out_shape=stats_shape,
        compiler_params=cparams)(xm, w1, w2, bn1)
    scale2, shift2 = _finalize_bn(s2, small[2], small[3], true_b)
    bn2 = (jnp.zeros((8, LANE), jnp.float32)
           .at[0].set(scale2).at[1].set(shift2).at[2].set(small[4]))   # row 2 = b3

    # Sweep 3: full forward, lane-dense (out_size, TB) output tiles.
    out = pl.pallas_call(
        functools.partial(_final_kernel, out_size, mm_dtype), grid=(nb,),
        in_specs=[x_spec, w1_spec, w_spec, w_spec, bn_spec, bn_spec],
        out_specs=pl.BlockSpec((None, out_size, tb), lambda i: (i, 0, 0)),
        out_shape=jax.ShapeDtypeStruct((nb, out_size, tb), jnp.float32),
        compiler_params=cparams)(xm, w1, w2, w3, bn1, bn2)

    # (nb, out, tb) -> (B, out); rows past the true batch are dropped.
    return out.transpose(0, 2, 1).reshape(b_pad, out_size)[:true_b]


# --------------------------------------------------------------------------- #
# Public wrapper                                                              #
# --------------------------------------------------------------------------- #
def naive_model_sig(x, params, *, block_b=256, use_grid=None):
    """x: [B, input_size] float array. Returns [B, output_size] float32
    (PyTorch training-mode BatchNorm semantics, dropout p=0 -> identity)."""
    B, in_features = x.shape
    if B < 2:
        raise ValueError("BatchNorm1d with batch statistics needs batch size >= 2.")
    in_pad = params["w1"].shape[0]
    out_size = params["output_size"]
    mm_dtype = params["w1"].dtype

    xm = x.astype(mm_dtype)
    if in_pad != in_features:
        xm = jnp.pad(xm, ((0, 0), (0, in_pad - in_features)))

    if use_grid is None:
        use_grid = B > 1024          # single VMEM-resident block is fine below this
    if not use_grid:
        return _forward_single_block(xm, params, B, out_size)
    assert block_b % 128 == 0, "batch tile must be a multiple of 128"
    return _forward_gridded(xm, params, B, out_size, block_b)


def init_params(key, input_size, output_size=1, embedding_size=100,
                hidden_size=20, matmul_dtype=jnp.bfloat16):
    """Deterministic init matching NaiveModel.__init__ (kaiming_normal_ weights,
    zero Linear biases, BN gamma=1 / beta=0), stored in kernel-friendly layout:
    weights transposed to [in, out] and zero-padded to 128 lanes; gamma/beta/b3
    zero-padded so pad lanes stay exactly zero through BN/ReLU and both matmuls."""
    assert embedding_size <= LANE and hidden_size <= LANE and output_size <= LANE
    k1, k2, k3 = jax.random.split(key, 3)
    in_pad = max(IN_PAD_MULT,
                 ((input_size + IN_PAD_MULT - 1) // IN_PAD_MULT) * IN_PAD_MULT)

    def kaiming_t(k, fan_in, fan_out):
        std = math.sqrt(2.0 / fan_in)   # kaiming_normal_ default (fan_in, relu gain)
        w = jax.random.normal(k, (fan_out, fan_in), jnp.float32) * std
        return w.T                       # [in, out] so the kernel computes x @ W

    def pad2(w, rows, cols):
        out = jnp.zeros((rows, cols), jnp.float32)
        return out.at[: w.shape[0], : w.shape[1]].set(w)

    w1 = pad2(kaiming_t(k1, input_size, embedding_size), in_pad, LANE)
    w2 = pad2(kaiming_t(k2, embedding_size, hidden_size), LANE, LANE)
    w3 = pad2(kaiming_t(k3, hidden_size, output_size), LANE, LANE)

    # Packed small params: rows = (gamma1, beta1, gamma2, beta2, fc3 bias, 0, 0, 0).
    small = jnp.zeros((8, LANE), jnp.float32)
    small = small.at[0, :embedding_size].set(1.0)   # gamma1 (pad lanes stay 0)
    small = small.at[2, :hidden_size].set(1.0)      # gamma2 (pad lanes stay 0)
    #       rows 1, 3 (beta) and 4 (fc3 bias) stay zero (module init)

    return {
        "w1": w1.astype(matmul_dtype),
        "w2": w2.astype(matmul_dtype),
        "w3": w3.astype(matmul_dtype),
        "small": small,
        "output_size": output_size,
    }


if __name__ == "__main__":
    key = jax.random.PRNGKey(0)
    kx, kp = jax.random.split(key)

    INPUT_SIZE, EMB, HID, OUT = 32, 100, 20, 1

    # f32 parameters for a tight-ish numerical check of both code paths.
    params32 = init_params(kp, INPUT_SIZE, output_size=OUT, embedding_size=EMB,
                           hidden_size=HID, matmul_dtype=jnp.float32)
    w1r = params32["w1"][:INPUT_SIZE, :EMB]
    w2r = params32["w2"][:EMB, :HID]
    w3r = params32["w3"][:HID, :OUT]

    def reference(xf):
        hi = jax.lax.Precision.HIGHEST

        def bn_relu(h):
            mu = jnp.mean(h, axis=0, keepdims=True)
            var = jnp.mean((h - mu) ** 2, axis=0, keepdims=True)
            return jnp.maximum((h - mu) * jax.lax.rsqrt(var + BN_EPS), 0.0)

        h = bn_relu(jnp.dot(xf, w1r, precision=hi))
        h = bn_relu(jnp.dot(h, w2r, precision=hi))
        return jax.nn.sigmoid(jnp.dot(h, w3r, precision=hi))

    # Tolerance is loose enough to absorb either f32 matmul algorithm inside the
    # kernel (single-pass bf16 vs multi-pass); structural bugs give O(0.1) errors.
    TOL = 2e-2

    # --- small-batch single-block path --------------------------------------
    B_small = 8
    x_small = jax.random.normal(kx, (B_small, INPUT_SIZE), jnp.float32)
    out_small = jax.block_until_ready(naive_model_sig(x_small, params32))
    assert out_small.shape == (B_small, OUT)
    assert bool(jnp.allclose(out_small, reference(x_small), atol=TOL)), "single-block mismatch"

    # --- gridded 3-sweep path (partial last tile exercises the row mask) ----
    B_big = 600
    x_big = jax.random.normal(jax.random.fold_in(kx, 1), (B_big, INPUT_SIZE), jnp.float32)
    out_big = jax.block_until_ready(
        naive_model_sig(x_big, params32, block_b=256, use_grid=True))
    assert out_big.shape == (B_big, OUT)
    assert bool(jnp.allclose(out_big, reference(x_big), atol=TOL)), "gridded mismatch"

    # --- default bf16 (MXU-native) parameters: exercise both paths ----------
    params_bf = init_params(kp, INPUT_SIZE, output_size=OUT, embedding_size=EMB,
                            hidden_size=HID, matmul_dtype=jnp.bfloat16)
    o1 = jax.block_until_ready(naive_model_sig(x_small, params_bf))
    o2 = jax.block_until_ready(
        naive_model_sig(x_big, params_bf, block_b=256, use_grid=True))
    assert o1.shape == (B_small, OUT) and o2.shape == (B_big, OUT)
    assert bool(jnp.all((o1 > 0.0) & (o1 < 1.0)))
    assert bool(jnp.all((o2 > 0.0) & (o2 < 1.0)))

    print("KERNEL_OK")
</pallas_src>

<mosaic_0001>
module attributes {stable_mosaic.version = 11 : i64} {
  func.func @_single_block_kernel(%arg0: memref<8x32xf32, #tpu.memory_space<vmem>>, %arg1: memref<32x128xf32, #tpu.memory_space<vmem>>, %arg2: memref<128x128xf32, #tpu.memory_space<vmem>>, %arg3: memref<128x128xf32, #tpu.memory_space<vmem>>, %arg4: memref<8x128xf32, #tpu.memory_space<vmem>>, %arg5: memref<8x128xf32, #tpu.memory_space<vmem>>) attributes {dimension_semantics = [], scalar_prefetch = 0 : i64, scratch_operands = 0 : i64, tpu.core_type = #tpu.core_type<tc>} {
    %c0 = arith.constant 0 : index
    %c0_0 = arith.constant 0 : index
    %0 = vector.load %arg4[%c0, %c0_0] : memref<8x128xf32, #tpu.memory_space<vmem>>, vector<1x128xf32>
    %c1 = arith.constant 1 : index
    %c0_1 = arith.constant 0 : index
    %1 = vector.load %arg4[%c1, %c0_1] : memref<8x128xf32, #tpu.memory_space<vmem>>, vector<1x128xf32>
    %c2 = arith.constant 2 : index
    %c0_2 = arith.constant 0 : index
    %2 = vector.load %arg4[%c2, %c0_2] : memref<8x128xf32, #tpu.memory_space<vmem>>, vector<1x128xf32>
    %c3 = arith.constant 3 : index
    %c0_3 = arith.constant 0 : index
    %3 = vector.load %arg4[%c3, %c0_3] : memref<8x128xf32, #tpu.memory_space<vmem>>, vector<1x128xf32>
    %c4 = arith.constant 4 : index
    %c0_4 = arith.constant 0 : index
    %4 = vector.load %arg4[%c4, %c0_4] : memref<8x128xf32, #tpu.memory_space<vmem>>, vector<1x128xf32>
    %c0_5 = arith.constant 0 : index
    %c0_6 = arith.constant 0 : index
    %5 = vector.load %arg0[%c0_5, %c0_6] : memref<8x32xf32, #tpu.memory_space<vmem>>, vector<8x32xf32>
    %c0_7 = arith.constant 0 : index
    %c0_8 = arith.constant 0 : index
    %6 = vector.load %arg1[%c0_7, %c0_8] : memref<32x128xf32, #tpu.memory_space<vmem>>, vector<32x128xf32>
    %cst = arith.constant dense<0.000000e+00> : vector<8x128xf32>
    %7 = tpu.matmul %5, %6, %cst {dimension_numbers = #tpu.dot_dimension_numbers<[1], [0], [0], [1], [0, 0, 1, 1], [], []>} : vector<8x32xf32>, vector<32x128xf32>, vector<8x128xf32> -> vector<8x128xf32>
    %cst_9 = arith.constant dense<0.000000e+00> : vector<128xf32>
    %8 = vector.multi_reduction <add>, %7, %cst_9 [0] : vector<8x128xf32> to vector<128xf32>
    %9 = vector.shape_cast %8 : vector<128xf32> to vector<1x128xf32>
    %cst_10 = arith.constant 8.000000e+00 : f32
    %10 = vector.broadcast %cst_10 : f32 to vector<1x128xf32>
    %11 = arith.divf %9, %10 : vector<1x128xf32>
    %12 = vector.broadcast %11 : vector<1x128xf32> to vector<8x128xf32>
    %13 = arith.subf %7, %12 : vector<8x128xf32>
    %14 = arith.mulf %13, %13 : vector<8x128xf32>
    %cst_11 = arith.constant dense<0.000000e+00> : vector<128xf32>
    %15 = vector.multi_reduction <add>, %14, %cst_11 [0] : vector<8x128xf32> to vector<128xf32>
    %16 = vector.shape_cast %15 : vector<128xf32> to vector<1x128xf32>
    %cst_12 = arith.constant 8.000000e+00 : f32
    %17 = vector.broadcast %cst_12 : f32 to vector<1x128xf32>
    %18 = arith.divf %16, %17 : vector<1x128xf32>
    %cst_13 = arith.constant 9.99999974E-6 : f32
    %19 = vector.broadcast %cst_13 : f32 to vector<1x128xf32>
    %20 = arith.addf %18, %19 : vector<1x128xf32>
    %21 = math.rsqrt %20 : vector<1x128xf32>
    %22 = arith.mulf %0, %21 : vector<1x128xf32>
    %23 = vector.broadcast %22 : vector<1x128xf32> to vector<8x128xf32>
    %24 = arith.mulf %13, %23 : vector<8x128xf32>
    %25 = vector.broadcast %1 : vector<1x128xf32> to vector<8x128xf32>
    %26 = arith.addf %24, %25 : vector<8x128xf32>
    %cst_14 = arith.constant 0.000000e+00 : f32
    %27 = vector.broadcast %cst_14 : f32 to vector<8x128xf32>
    %28 = arith.maximumf %26, %27 : vector<8x128xf32>
    %c0_15 = arith.constant 0 : index
    %c0_16 = arith.constant 0 : index
    %29 = vector.load %arg2[%c0_15, %c0_16] : memref<128x128xf32, #tpu.memory_space<vmem>>, vector<128x128xf32>
    %cst_17 = arith.constant dense<0.000000e+00> : vector<8x128xf32>
    %30 = tpu.matmul %28, %29, %cst_17 {dimension_numbers = #tpu.dot_dimension_numbers<[1], [0], [0], [1], [0, 0, 1, 1], [], []>} : vector<8x128xf32>, vector<128x128xf32>, vector<8x128xf32> -> vector<8x128xf32>
    %cst_18 = arith.constant dense<0.000000e+00> : vector<128xf32>
    %31 = vector.multi_reduction <add>, %30, %cst_18 [0] : vector<8x128xf32> to vector<128xf32>
    %32 = vector.shape_cast %31 : vector<128xf32> to vector<1x128xf32>
    %cst_19 = arith.constant 8.000000e+00 : f32
    %33 = vector.broadcast %cst_19 : f32 to vector<1x128xf32>
    %34 = arith.divf %32, %33 : vector<1x128xf32>
    %35 = vector.broadcast %34 : vector<1x128xf32> to vector<8x128xf32>
    %36 = arith.subf %30, %35 : vector<8x128xf32>
    %37 = arith.mulf %36, %36 : vector<8x128xf32>
    %cst_20 = arith.constant dense<0.000000e+00> : vector<128xf32>
    %38 = vector.multi_reduction <add>, %37, %cst_20 [0] : vector<8x128xf32> to vector<128xf32>
    %39 = vector.shape_cast %38 : vector<128xf32> to vector<1x128xf32>
    %cst_21 = arith.constant 8.000000e+00 : f32
    %40 = vector.broadcast %cst_21 : f32 to vector<1x128xf32>
    %41 = arith.divf %39, %40 : vector<1x128xf32>
    %cst_22 = arith.constant 9.99999974E-6 : f32
    %42 = vector.broadcast %cst_22 : f32 to vector<1x128xf32>
    %43 = arith.addf %41, %42 : vector<1x128xf32>
    %44 = math.rsqrt %43 : vector<1x128xf32>
    %45 = arith.mulf %2, %44 : vector<1x128xf32>
    %46 = vector.broadcast %45 : vector<1x128xf32> to vector<8x128xf32>
    %47 = arith.mulf %36, %46 : vector<8x128xf32>
    %48 = vector.broadcast %3 : vector<1x128xf32> to vector<8x128xf32>
    %49 = arith.addf %47, %48 : vector<8x128xf32>
    %cst_23 = arith.constant 0.000000e+00 : f32
    %50 = vector.broadcast %cst_23 : f32 to vector<8x128xf32>
    %51 = arith.maximumf %49, %50 : vector<8x128xf32>
    %c0_24 = arith.constant 0 : index
    %c0_25 = arith.constant 0 : index
    %52 = vector.load %arg3[%c0_24, %c0_25] : memref<128x128xf32, #tpu.memory_space<vmem>>, vector<128x128xf32>
    %cst_26 = arith.constant dense<0.000000e+00> : vector<8x128xf32>
    %53 = tpu.matmul %51, %52, %cst_26 {dimension_numbers = #tpu.dot_dimension_numbers<[1], [0], [0], [1], [0, 0, 1, 1], [], []>} : vector<8x128xf32>, vector<128x128xf32>, vector<8x128xf32> -> vector<8x128xf32>
    %54 = vector.broadcast %4 : vector<1x128xf32> to vector<8x128xf32>
    %55 = arith.addf %53, %54 : vector<8x128xf32>
    %56 = arith.negf %55 : vector<8x128xf32>
    %57 = math.exp %56 : vector<8x128xf32>
    %cst_27 = arith.constant 1.000000e+00 : f32
    %58 = vector.broadcast %cst_27 : f32 to vector<8x128xf32>
    %59 = arith.addf %58, %57 : vector<8x128xf32>
    %60 = arith.divf %58, %59 : vector<8x128xf32>
    %c0_28 = arith.constant 0 : index
    %c0_29 = arith.constant 0 : index
    %61 = vector.load %arg5[%c0_28, %c0_29] : memref<8x128xf32, #tpu.memory_space<vmem>>, vector<8x128xf32>
    tpu.vector_store %arg5[%c0_28, %c0_29], %60 {strides = array<i32>} : memref<8x128xf32, #tpu.memory_space<vmem>>, vector<8x128xf32>,
    return
  }
}

</mosaic_0001>

<llo_original>
// kernel: tpu_custom_call.1
$region0: #{tpu_custom_call.1}
  #allocation0 [shape = 'u32[]', space=smem, size = 0x4, offset = 0x4, fixed_abs, tag = 'smem constant byte address 0x4 - core index']
  #allocation1 [shape = 'u32[144,128]{1,0:T(1,128)}', space=vmem, size = 0x12000, scoped, tag = 'internal scratch']
  %s0 = inlined_call_operand.hbm [shape: f32[8,32], index: 0, kind: input, shape index: {}]
  %s1 = inlined_call_operand.hbm [shape: f32[32,128], index: 1, kind: input, shape index: {}]
  %s2 = inlined_call_operand.hbm [shape: f32[128,128], index: 2, kind: input, shape index: {}]
  %s3 = inlined_call_operand.hbm [shape: f32[128,128], index: 3, kind: input, shape index: {}]
  %s4 = inlined_call_operand.hbm [shape: f32[8,128], index: 4, kind: input, shape index: {}]
  %s5 = inlined_call_operand.hbm [shape: f32[8,128], index: 5, kind: output, shape index: {}]
  %s6 = sld [smem:[#allocation0]]
  $region50: #{tpu_custom_call.1} parent=0
    _
  %s8 = ssub.s32 1, %s6
  %s9 = scalar_select 0, %s8, %s6
  $region1: #{tpu_custom_call.1} parent=0
    #allocation2 [shape = 'u8[4096]{0}', space=vmem, size = 0x1000, scoped, tag = 'input window, operand 0, single buffered']
    #allocation3 [shape = 's32[1]{0}', space=sflag, size = 0x4, scoped, tag = 'scoped memory for tpu_custom_call.1']
    #allocation4 [shape = 's32[1]{0}', space=sflag, size = 0x4, scoped, tag = 'scoped memory for tpu_custom_call.1']
    #allocation5 [shape = 'u8[16384]{0}', space=vmem, size = 0x4000, scoped, tag = 'input window, operand 1, single buffered']
    #allocation6 [shape = 's32[1]{0}', space=sflag, size = 0x4, scoped, tag = 'scoped memory for tpu_custom_call.1']
    #allocation7 [shape = 'u8[65536]{0}', space=vmem, size = 0x10000, scoped, tag = 'input window, operand 2, single buffered']
    #allocation8 [shape = 'u8[65536]{0}', space=vmem, size = 0x10000, scoped, tag = 'input window, operand 3, single buffered']
    #allocation9 [shape = 's32[1]{0}', space=sflag, size = 0x4, scoped, tag = 'scoped memory for tpu_custom_call.1']
    #allocation10 [shape = 'u8[4096]{0}', space=vmem, size = 0x1000, scoped, tag = 'input window, operand 4, single buffered']
    #allocation11 [shape = 'u8[4096]{0}', space=vmem, size = 0x1000, scoped, tag = 'output window, operand 0, single buffered']
    %10 = vsyncpa [#allocation3], 0
    %11 = vsyncpa [#allocation6], 0
    %12 = vsyncpa [#allocation9], 0
    %13 = vsyncpa [#allocation4], 0
    // Predicated region
    $region2: #{tpu_custom_call.1} parent=1 // pred_check
      _
    $region3: #{tpu_custom_call.1} parent=1 // pred_check_branch
      %15 = sbr.rel (0) target = $region5
    $region4: #{tpu_custom_call.1} parent=1 // pred_region
      %s17 = ssub.s32 128, 128
      %18 = vsyncadd [#allocation3], %s17
      %s20 = sshll.u32 [#allocation2], 4
      %s21 = int_to_ptr.vmem [resolvable:$true] %s20
      %23 = dma.hbm_to_vmem [thread:$0]  %s0, 128, %s21, [#allocation3]
    $region5: #{tpu_custom_call.1} parent=1 // pred_fallthru
      _
    // Predicated region
    $region6: #{tpu_custom_call.1} parent=1 // pred_check
      _
    $region7: #{tpu_custom_call.1} parent=1 // pred_check_branch
      %25 = sbr.rel (0) target = $region9
    $region8: #{tpu_custom_call.1} parent=1 // pred_region
      %s27 = ssub.s32 512, 512
      %28 = vsyncadd [#allocation6], %s27
      %s29 = sshll.u32 [#allocation5], 4
      %s30 = int_to_ptr.vmem [resolvable:$true] %s29
      %35 = dma.hbm_to_vmem [thread:$0]  %s1, 512, %s30, [#allocation6], 128, 128, 8
    $region9: #{tpu_custom_call.1} parent=1 // pred_fallthru
      _
    // Predicated region
    $region10: #{tpu_custom_call.1} parent=1 // pred_check
      _
    $region11: #{tpu_custom_call.1} parent=1 // pred_check_branch
      %37 = sbr.rel (0) target = $region13
    $region12: #{tpu_custom_call.1} parent=1 // pred_region
      %s39 = ssub.s32 2048, 2048
      %40 = vsyncadd [#allocation6], %s39
      %s41 = sshll.u32 [#allocation7], 4
      %s42 = int_to_ptr.vmem [resolvable:$true] %s41
      %47 = dma.hbm_to_vmem [thread:$0]  %s2, 2048, %s42, [#allocation6], 128, 128, 8
    $region13: #{tpu_custom_call.1} parent=1 // pred_fallthru
      _
    // Predicated region
    $region14: #{tpu_custom_call.1} parent=1 // pred_check
      _
    $region15: #{tpu_custom_call.1} parent=1 // pred_check_branch
      %49 = sbr.rel (0) target = $region17
    $region16: #{tpu_custom_call.1} parent=1 // pred_region
      %s51 = ssub.s32 2048, 2048
      %52 = vsyncadd [#allocation9], %s51
      %s53 = sshll.u32 [#allocation8], 4
      %s54 = int_to_ptr.vmem [resolvable:$true] %s53
      %59 = dma.hbm_to_vmem [thread:$0]  %s3, 2048, %s54, [#allocation9], 128, 128, 8
    $region17: #{tpu_custom_call.1} parent=1 // pred_fallthru
      _
    // Predicated region
    $region18: #{tpu_custom_call.1} parent=1 // pred_check
      _
    $region19: #{tpu_custom_call.1} parent=1 // pred_check_branch
      %61 = sbr.rel (0) target = $region21
    $region20: #{tpu_custom_call.1} parent=1 // pred_region
      %s63 = ssub.s32 128, 128
      %64 = vsyncadd [#allocation9], %s63
      %s66 = sshll.u32 [#allocation10], 4
      %s67 = int_to_ptr.vmem [resolvable:$true] %s66
      %69 = dma.hbm_to_vmem [thread:$0]  %s4, 128, %s67, [#allocation9]
    $region21: #{tpu_custom_call.1} parent=1 // pred_fallthru
      _
    // Predicated region
    $region22: #{tpu_custom_call.1} parent=1 // pred_check
      _
    $region23: #{tpu_custom_call.1} parent=1 // pred_check_branch
      %71 = sbr.rel (0) target = $region25
    $region24: #{tpu_custom_call.1} parent=1 // pred_region
      %72 = dma.done [#allocation3], 128
    $region25: #{tpu_custom_call.1} parent=1 // pred_fallthru
      _
    // Predicated region
    $region26: #{tpu_custom_call.1} parent=1 // pred_check
      _
    $region27: #{tpu_custom_call.1} parent=1 // pred_check_branch
      %74 = sbr.rel (0) target = $region29
    $region28: #{tpu_custom_call.1} parent=1 // pred_region
      %75 = dma.done [#allocation6], 512
    $region29: #{tpu_custom_call.1} parent=1 // pred_fallthru
      _
    // Predicated region
    $region30: #{tpu_custom_call.1} parent=1 // pred_check
      _
    $region31: #{tpu_custom_call.1} parent=1 // pred_check_branch
      %77 = sbr.rel (0) target = $region33
    $region32: #{tpu_custom_call.1} parent=1 // pred_region
      %78 = dma.done [#allocation6], 2048
    $region33: #{tpu_custom_call.1} parent=1 // pred_fallthru
      _
    // Predicated region
    $region34: #{tpu_custom_call.1} parent=1 // pred_check
      _
    $region35: #{tpu_custom_call.1} parent=1 // pred_check_branch
      %80 = sbr.rel (0) target = $region37
    $region36: #{tpu_custom_call.1} parent=1 // pred_region
      %81 = dma.done [#allocation9], 2048
    $region37: #{tpu_custom_call.1} parent=1 // pred_fallthru
      _
    // Predicated region
    $region38: #{tpu_custom_call.1} parent=1 // pred_check
      _
    $region39: #{tpu_custom_call.1} parent=1 // pred_check_branch
      %83 = sbr.rel (0) target = $region41
    $region40: #{tpu_custom_call.1} parent=1 // pred_region
      %84 = dma.done [#allocation9], 128
    $region41: #{tpu_custom_call.1} parent=1 // pred_fallthru
      _
    %v85 = vld [vmem:[#allocation10] sm:$0x1]
    %v86 = vld [vmem:[#allocation10 + $0x1] sm:$0x1]
    %v87 = vld [vmem:[#allocation10 + $0x2] sm:$0x1]
    %v88 = vld [vmem:[#allocation10 + $0x3] sm:$0x1]
    %v89 = vld [vmem:[#allocation10 + $0x4] sm:$0x1]
    %v90 = vld [vmem:[#allocation2] sm:$0xff]
    %v91 = vld [vmem:[#allocation5] sm:$0xff]
    %v92 = vld [vmem:[#allocation5 + $0x8] sm:$0xff]
    %v93 = vld [vmem:[#allocation5 + $0x10] sm:$0xff]
    %v94 = vld [vmem:[#allocation5 + $0x18] sm:$0xff]
    %vm95 = vcmask 261120
    %v97 = vsel %vm95, %v90, 0
    %99 = vmatprep.subr.mxu0 0.0
    %100 = vmatpush1.msra.mxu0 0.0
    %101 = vmatprep.subr.mxu0 0.0
    %102 = vmatpush1.msra.mxu0 0.0
    %103 = vmatprep.subr.mxu0 0.0
    %104 = vmatpush1.msra.mxu0 0.0
    %105 = vmatprep.subr.mxu0 0.0
    %106 = vmatpush1.msra.mxu0 0.0
    %107 = vmatprep.subr.mxu0 0.0
    %108 = vmatpush1.msra.mxu0 0.0
    %109 = vmatprep.subr.mxu0 0.0
    %110 = vmatpush1.msra.mxu0 0.0
    %111 = vmatprep.subr.mxu0 0.0
    %112 = vmatpush1.msra.mxu0 0.0
    %113 = vmatprep.subr.mxu0 0.0
    %114 = vmatpush1.msra.mxu0 0.0
    %115 = vmatprep.subr.mxu0 0.0
    %116 = vmatpush1.msra.mxu0 0.0
    %117 = vmatprep.subr.mxu0 0.0
    %118 = vmatpush1.msra.mxu0 0.0
    %119 = vmatprep.subr.mxu0 0.0
    %120 = vmatpush1.msra.mxu0 0.0
    %121 = vmatprep.subr.mxu0 0.0
    %122 = vmatpush1.msra.mxu0 0.0
    %123 = vmatprep.subr.mxu0 0.0
    %124 = vmatpush1.msra.mxu0 %v94
    %125 = vmatprep.subr.mxu0 0.0
    %126 = vmatpush1.msra.mxu0 %v93
    %127 = vmatprep.subr.mxu0 0.0
    %128 = vmatpush1.msra.mxu0 %v92
    %129 = vmatprep.subr.mxu0 0.0
    %130 = vmatpush1.msra.mxu0 %v91
    %131 = vmatprep.subr.mxu0 0.0
    %132 = vmatpush2.msra.mxu0 0.0
    %133 = vmatprep.subr.mxu0 0.0
    %134 = vmatpush2.msra.mxu0 0.0
    %135 = vmatprep.subr.mxu0 0.0
    %136 = vmatpush2.msra.mxu0 0.0
    %137 = vmatprep.subr.mxu0 0.0
    %138 = vmatpush2.msra.mxu0 0.0
    %139 = vmatprep.subr.mxu0 0.0
    %140 = vmatpush2.msra.mxu0 0.0
    %141 = vmatprep.subr.mxu0 0.0
    %142 = vmatpush2.msra.mxu0 0.0
    %143 = vmatprep.subr.mxu0 0.0
    %144 = vmatpush2.msra.mxu0 0.0
    %145 = vmatprep.subr.mxu0 0.0
    %146 = vmatpush2.msra.mxu0 0.0
    %147 = vmatprep.subr.mxu0 0.0
    %148 = vmatpush2.msra.mxu0 0.0
    %149 = vmatprep.subr.mxu0 0.0
    %150 = vmatpush2.msra.mxu0 0.0
    %151 = vmatprep.subr.mxu0 0.0
    %152 = vmatpush2.msra.mxu0 0.0
    %153 = vmatprep.subr.mxu0 0.0
    %154 = vmatpush2.msra.mxu0 0.0
    %155 = vmatprep.subr.mxu0 0.0
    %156 = vmatpush2.msra.mxu0 0.0
    %157 = vmatprep.subr.mxu0 0.0
    %158 = vmatpush2.msra.mxu0 0.0
    %159 = vmatprep.subr.mxu0 0.0
    %160 = vmatpush2.msra.mxu0 0.0
    %161 = vmatprep.subr.mxu0 0.0
    %162 = vmatpush2.msra.mxu0 0.0
    %163 = vmatprep.mubr.f32.mxu0 0.0
    %164 = vmatmul.mubr.f32.gmra.mxu0 %v97
    %v165 = vpop.f32.mrf.mxu0
    %v166 = vadd.f32 0.0, %v165
    %v167 = vpop.f32.mrf.mxu0
    %168 = vdwg.mxu0
    %v169 = vrot.slane %v166, 4
    %v170 = vadd.f32 %v166, %v169
    %v171 = vrot.slane %v170, 2
    %v172 = vadd.f32 %v170, %v171
    %v173 = vrot.slane %v172, 1
    %v174 = vadd.f32 %v172, %v173
    %v175 = vrcp.pop 8.0
    %v176 = vmul.f32 %v174, %v175
    %v177 = vsub.f32 %v166, %v176
    %v178 = vmul.f32 %v177, %v177
    %v179 = vrot.slane %v178, 4
    %v180 = vadd.f32 %v178, %v179
    %v181 = vrot.slane %v180, 2
    %v182 = vadd.f32 %v180, %v181
    %v183 = vrot.slane %v182, 1
    %v184 = vadd.f32 %v182, %v183
    %v185 = vmul.f32 %v184, %v175
    %v186 = vadd.f32 %v185, 1e-05
    %v187 = vrsqrt.pop %v186
    %v188 = vmul.f32 %v85, %v187
    %v189 = vlaneseq
    %v190 = vshrl.u32 %v189, 7
    %v191 = vsub.s32 0, %v190
    %v192 = vrot.slane %v188, %v191
    %v193 = vmul.f32 %v177, %v192
    %v194 = vlaneseq
    %v195 = vshrl.u32 %v194, 7
    %v196 = vsub.s32 0, %v195
    %v197 = vrot.slane %v86, %v196
    %v198 = vadd.f32 %v193, %v197
    %v199 = vmax.f32 %v198, 0.0
    %v200 = vld [vmem:[#allocation7] sm:$0xff]
    %v201 = vld [vmem:[#allocation7 + $0x8] sm:$0xff]
    %v202 = vld [vmem:[#allocation7 + $0x10] sm:$0xff]
    %v203 = vld [vmem:[#allocation7 + $0x18] sm:$0xff]
    %v204 = vld [vmem:[#allocation7 + $0x20] sm:$0xff]
    %v205 = vld [vmem:[#allocation7 + $0x28] sm:$0xff]
    %v206 = vld [vmem:[#allocation7 + $0x30] sm:$0xff]
    %v207 = vld [vmem:[#allocation7 + $0x38] sm:$0xff]
    %v208 = vld [vmem:[#allocation7 + $0x40] sm:$0xff]
    %v209 = vld [vmem:[#allocation7 + $0x48] sm:$0xff]
    %v210 = vld [vmem:[#allocation7 + $0x50] sm:$0xff]
    %v211 = vld [vmem:[#allocation7 + $0x58] sm:$0xff]
    %v212 = vld [vmem:[#allocation7 + $0x60] sm:$0xff]
    %v213 = vld [vmem:[#allocation7 + $0x68] sm:$0xff]
    %v214 = vld [vmem:[#allocation7 + $0x70] sm:$0xff]
    %v215 = vld [vmem:[#allocation7 + $0x78] sm:$0xff]
    %216 = vmatprep.subr.mxu0 0.0
    %217 = vmatpush1.msra.mxu0 %v215
    %218 = vmatprep.subr.mxu0 0.0
    %219 = vmatpush1.msra.mxu0 %v214
    %220 = vmatprep.subr.mxu0 0.0
    %221 = vmatpush1.msra.mxu0 %v213
    %222 = vmatprep.subr.mxu0 0.0
    %223 = vmatpush1.msra.mxu0 %v212
    %224 = vmatprep.subr.mxu0 0.0
    %225 = vmatpush1.msra.mxu0 %v211
    %226 = vmatprep.subr.mxu0 0.0
    %227 = vmatpush1.msra.mxu0 %v210
    %228 = vmatprep.subr.mxu0 0.0
    %229 = vmatpush1.msra.mxu0 %v209
    %230 = vmatprep.subr.mxu0 0.0
    %231 = vmatpush1.msra.mxu0 %v208
    %232 = vmatprep.subr.mxu0 0.0
    %233 = vmatpush1.msra.mxu0 %v207
    %234 = vmatprep.subr.mxu0 0.0
    %235 = vmatpush1.msra.mxu0 %v206
    %236 = vmatprep.subr.mxu0 0.0
    %237 = vmatpush1.msra.mxu0 %v205
    %238 = vmatprep.subr.mxu0 0.0
    %239 = vmatpush1.msra.mxu0 %v204
    %240 = vmatprep.subr.mxu0 0.0
    %241 = vmatpush1.msra.mxu0 %v203
    %242 = vmatprep.subr.mxu0 0.0
    %243 = vmatpush1.msra.mxu0 %v202
    %244 = vmatprep.subr.mxu0 0.0
    %245 = vmatpush1.msra.mxu0 %v201
    %246 = vmatprep.subr.mxu0 0.0
    %247 = vmatpush1.msra.mxu0 %v200
    %248 = vmatprep.subr.mxu0 0.0
    %249 = vmatpush2.msra.mxu0 0.0
    %250 = vmatprep.subr.mxu0 0.0
    %251 = vmatpush2.msra.mxu0 0.0
    %252 = vmatprep.subr.mxu0 0.0
    %253 = vmatpush2.msra.mxu0 0.0
    %254 = vmatprep.subr.mxu0 0.0
    %255 = vmatpush2.msra.mxu0 0.0
    %256 = vmatprep.subr.mxu0 0.0
    %257 = vmatpush2.msra.mxu0 0.0
    %258 = vmatprep.subr.mxu0 0.0
    %259 = vmatpush2.msra.mxu0 0.0
    %260 = vmatprep.subr.mxu0 0.0
    %261 = vmatpush2.msra.mxu0 0.0
    %262 = vmatprep.subr.mxu0 0.0
    %263 = vmatpush2.msra.mxu0 0.0
    %264 = vmatprep.subr.mxu0 0.0
    %265 = vmatpush2.msra.mxu0 0.0
    %266 = vmatprep.subr.mxu0 0.0
    %267 = vmatpush2.msra.mxu0 0.0
    %268 = vmatprep.subr.mxu0 0.0
    %269 = vmatpush2.msra.mxu0 0.0
    %270 = vmatprep.subr.mxu0 0.0
    %271 = vmatpush2.msra.mxu0 0.0
    %272 = vmatprep.subr.mxu0 0.0
    %273 = vmatpush2.msra.mxu0 0.0
    %274 = vmatprep.subr.mxu0 0.0
    %275 = vmatpush2.msra.mxu0 0.0
    %276 = vmatprep.subr.mxu0 0.0
    %277 = vmatpush2.msra.mxu0 0.0
    %278 = vmatprep.subr.mxu0 0.0
    %279 = vmatpush2.msra.mxu0 0.0
    %280 = vmatprep.mubr.f32.mxu0 0.0
    %281 = vmatmul.mubr.f32.gmra.mxu0 %v199
    %v282 = vpop.f32.mrf.mxu0
    %v283 = vadd.f32 0.0, %v282
    %v284 = vpop.f32.mrf.mxu0
    %285 = vdwg.mxu0
    %v286 = vrot.slane %v283, 4
    %v287 = vadd.f32 %v283, %v286
    %v288 = vrot.slane %v287, 2
    %v289 = vadd.f32 %v287, %v288
    %v290 = vrot.slane %v289, 1
    %v291 = vadd.f32 %v289, %v290
    %v292 = vmul.f32 %v291, %v175
    %v293 = vsub.f32 %v283, %v292
    %v294 = vmul.f32 %v293, %v293
    %v295 = vrot.slane %v294, 4
    %v296 = vadd.f32 %v294, %v295
    %v297 = vrot.slane %v296, 2
    %v298 = vadd.f32 %v296, %v297
    %v299 = vrot.slane %v298, 1
    %v300 = vadd.f32 %v298, %v299
    %v301 = vmul.f32 %v300, %v175
    %v302 = vadd.f32 %v301, 1e-05
    %v303 = vrsqrt.pop %v302
    %v304 = vmul.f32 %v87, %v303
    %v305 = vlaneseq
    %v306 = vshrl.u32 %v305, 7
    %v307 = vsub.s32 0, %v306
    %v308 = vrot.slane %v304, %v307
    %v309 = vmul.f32 %v293, %v308
    %v310 = vlaneseq
    %v311 = vshrl.u32 %v310, 7
    %v312 = vsub.s32 0, %v311
    %v313 = vrot.slane %v88, %v312
    %v314 = vadd.f32 %v309, %v313
    %v315 = vmax.f32 %v314, 0.0
    %v316 = vld [vmem:[#allocation8] sm:$0xff]
    %v317 = vld [vmem:[#allocation8 + $0x8] sm:$0xff]
    %v318 = vld [vmem:[#allocation8 + $0x10] sm:$0xff]
    %v319 = vld [vmem:[#allocation8 + $0x18] sm:$0xff]
    %v320 = vld [vmem:[#allocation8 + $0x20] sm:$0xff]
    %v321 = vld [vmem:[#allocation8 + $0x28] sm:$0xff]
    %v322 = vld [vmem:[#allocation8 + $0x30] sm:$0xff]
    %v323 = vld [vmem:[#allocation8 + $0x38] sm:$0xff]
    %v324 = vld [vmem:[#allocation8 + $0x40] sm:$0xff]
    %v325 = vld [vmem:[#allocation8 + $0x48] sm:$0xff]
    %v326 = vld [vmem:[#allocation8 + $0x50] sm:$0xff]
    %v327 = vld [vmem:[#allocation8 + $0x58] sm:$0xff]
    %v328 = vld [vmem:[#allocation8 + $0x60] sm:$0xff]
    %v329 = vld [vmem:[#allocation8 + $0x68] sm:$0xff]
    %v330 = vld [vmem:[#allocation8 + $0x70] sm:$0xff]
    %v331 = vld [vmem:[#allocation8 + $0x78] sm:$0xff]
    %v332 = vlaneseq
    %v333 = vshrl.u32 %v332, 7
    %v334 = vsub.s32 0, %v333
    %v335 = vrot.slane %v89, %v334
    %336 = vmatprep.subr.mxu0 0.0
    %337 = vmatpush1.msra.mxu0 %v331
    %338 = vmatprep.subr.mxu0 0.0
    %339 = vmatpush1.msra.mxu0 %v330
    %340 = vmatprep.subr.mxu0 0.0
    %341 = vmatpush1.msra.mxu0 %v329
    %342 = vmatprep.subr.mxu0 0.0
    %343 = vmatpush1.msra.mxu0 %v328
    %344 = vmatprep.subr.mxu0 0.0
    %345 = vmatpush1.msra.mxu0 %v327
    %346 = vmatprep.subr.mxu0 0.0
    %347 = vmatpush1.msra.mxu0 %v326
    %348 = vmatprep.subr.mxu0 0.0
    %349 = vmatpush1.msra.mxu0 %v325
    %350 = vmatprep.subr.mxu0 0.0
    %351 = vmatpush1.msra.mxu0 %v324
    %352 = vmatprep.subr.mxu0 0.0
    %353 = vmatpush1.msra.mxu0 %v323
    %354 = vmatprep.subr.mxu0 0.0
    %355 = vmatpush1.msra.mxu0 %v322
    %356 = vmatprep.subr.mxu0 0.0
    %357 = vmatpush1.msra.mxu0 %v321
    %358 = vmatprep.subr.mxu0 0.0
    %359 = vmatpush1.msra.mxu0 %v320
    %360 = vmatprep.subr.mxu0 0.0
    %361 = vmatpush1.msra.mxu0 %v319
    %362 = vmatprep.subr.mxu0 0.0
    %363 = vmatpush1.msra.mxu0 %v318
    %364 = vmatprep.subr.mxu0 0.0
    %365 = vmatpush1.msra.mxu0 %v317
    %366 = vmatprep.subr.mxu0 0.0
    %367 = vmatpush1.msra.mxu0 %v316
    %368 = vmatprep.subr.mxu0 0.0
    %369 = vmatpush2.msra.mxu0 0.0
    %370 = vmatprep.subr.mxu0 0.0
    %371 = vmatpush2.msra.mxu0 0.0
    %372 = vmatprep.subr.mxu0 0.0
    %373 = vmatpush2.msra.mxu0 0.0
    %374 = vmatprep.subr.mxu0 0.0
    %375 = vmatpush2.msra.mxu0 0.0
    %376 = vmatprep.subr.mxu0 0.0
    %377 = vmatpush2.msra.mxu0 0.0
    %378 = vmatprep.subr.mxu0 0.0
    %379 = vmatpush2.msra.mxu0 0.0
    %380 = vmatprep.subr.mxu0 0.0
    %381 = vmatpush2.msra.mxu0 0.0
    %382 = vmatprep.subr.mxu0 0.0
    %383 = vmatpush2.msra.mxu0 0.0
    %384 = vmatprep.subr.mxu0 0.0
    %385 = vmatpush2.msra.mxu0 0.0
    %386 = vmatprep.subr.mxu0 0.0
    %387 = vmatpush2.msra.mxu0 0.0
    %388 = vmatprep.subr.mxu0 0.0
    %389 = vmatpush2.msra.mxu0 0.0
    %390 = vmatprep.subr.mxu0 0.0
    %391 = vmatpush2.msra.mxu0 0.0
    %392 = vmatprep.subr.mxu0 0.0
    %393 = vmatpush2.msra.mxu0 0.0
    %394 = vmatprep.subr.mxu0 0.0
    %395 = vmatpush2.msra.mxu0 0.0
    %396 = vmatprep.subr.mxu0 0.0
    %397 = vmatpush2.msra.mxu0 0.0
    %398 = vmatprep.subr.mxu0 0.0
    %399 = vmatpush2.msra.mxu0 0.0
    %400 = vmatprep.mubr.f32.mxu0 0.0
    %401 = vmatmul.mubr.f32.gmra.mxu0 %v315
    %v402 = vpop.f32.mrf.mxu0
    %v403 = vadd.f32 %v335, %v402
    %v404 = vpop.f32.mrf.mxu0
    %405 = vdwg.mxu0
    %v406 = vxor.u32 %v403, 2147483648
    %v407 = vmul.f32 %v406, 1.442695
    %v408 = vpow.pop %v407
    %v409 = vadd.f32 %v408, 1.0
    %v410 = vrcp.pop %v409
    %v411 = vmul.f32 1.0, %v410
    %412 = vst [vmem:[#allocation11] sm:$0xff] %v411
    // Predicated region
    $region42: #{tpu_custom_call.1} parent=1 // pred_check
      _
    $region43: #{tpu_custom_call.1} parent=1 // pred_check_branch
      %414 = sbr.rel (0) target = $region45
    $region44: #{tpu_custom_call.1} parent=1 // pred_region
      %s416 = ssub.s32 128, 128
      %417 = vsyncadd [#allocation4], %s416
      %s419 = sshll.u32 [#allocation11], 4
      %s420 = int_to_ptr.vmem [resolvable:$true] %s419
      %422 = dma.vmem_to_hbm [thread:$0]  %s420, 128, %s5, [#allocation4]
    $region45: #{tpu_custom_call.1} parent=1 // pred_fallthru
      _
    // Predicated region
    $region46: #{tpu_custom_call.1} parent=1 // pred_check
      _
    $region47: #{tpu_custom_call.1} parent=1 // pred_check_branch
      %424 = sbr.rel (0) target = $region49
    $region48: #{tpu_custom_call.1} parent=1 // pred_region
      %425 = dma.done [#allocation4], 128
    $region49: #{tpu_custom_call.1} parent=1 // pred_fallthru
      _
    %426 = vsyncpa [#allocation3], 1
    %427 = vsyncpa [#allocation6], 1
    %428 = vsyncpa [#allocation9], 1
    %429 = vsyncpa [#allocation4], 1

</llo_original>
